<compile_context>
chip_gen: v5e
topology: v5e:2x2
jax: 0.10.0
libtpu: 0.0.40
codegen_flags: <defaults>
</compile_context>

<pallas_src>
import functools

import jax
import jax.numpy as jnp
from jax.experimental import pallas as pl
from jax.experimental.pallas import tpu as pltpu

LANE = 128
SUBLANE = 8
NUM_PARALLEL = 2      # megacore split (leading "parallel" grid axis)
TILE_M_MAX = 512      # rows per block; 2 inputs * 2 bufs * 512*128*4B = 1 MiB VMEM


def _bce_blur_kernel(pred_ref, true_ref, out_ref, *, inv_alpha):
    # out_ref is a (8,128) partial-sum accumulator, resident across the
    # sequential (arbitrary) k axis; one instance per parallel index p.
    @pl.when(pl.program_id(1) == 0)
    def _init():
        out_ref[...] = jnp.zeros_like(out_ref)

    x = pred_ref[...]            # (tile_m, 128) f32
    y = true_ref[...]

    # Shared exp(-|x|) drives both the stable BCE log-term and the sigmoid.
    e = jnp.exp(-jnp.abs(x))
    #   BCEWithLogits (stable): max(x,0) - x*y + log(1 + exp(-|x|))
    bce = jnp.maximum(x, 0.0) - x * y + jnp.log1p(e)
    #   sigmoid(x) = 1/(1+e) if x>=0 else e/(1+e)   (exact reciprocal for
    #   bit-faithful semantics; pl.reciprocal(approx=True) would trade ~1e-3
    #   relative error for a cheaper EUP path).
    inv1pe = 1.0 / (1.0 + e)
    p = jnp.where(x >= 0.0, inv1pe, e * inv1pe)

    dx = p - y
    alpha_factor = 1.0 - jnp.exp((dx - 1.0) * inv_alpha)
    loss = bce * alpha_factor

    # Pure-VPU partial reduction: fold the tile's rows into one (8,128) slab
    # (splitting the sublane axis on an 8-boundary is a free relayout), then
    # accumulate into the resident output block.  The XLU cross-lane reduce
    # happens exactly once, in the wrapper.
    tm = loss.shape[0]
    out_ref[...] += loss.reshape(tm // SUBLANE, SUBLANE, LANE).sum(axis=0)


def bce_blur_with_logits_loss(pred, true, alpha=0.05):
    """Scalar mean BCE-blur loss, computed in a Pallas TPU kernel."""
    assert pred.shape == true.shape
    n = pred.size
    inv_alpha = 1.0 / (float(alpha) + 1e-4)   # fold the divide at trace time

    pred_flat = pred.reshape(-1).astype(jnp.float32)
    true_flat = true.reshape(-1).astype(jnp.float32)

    # Tiling: flatten -> (NUM_PARALLEL, rows_per_p, 128), rows_per_p a multiple
    # of the chosen tile_m (itself a multiple of 8, capped at TILE_M_MAX).
    rows = pl.cdiv(n, LANE)
    rows_per_p = pl.cdiv(rows, NUM_PARALLEL)
    rows_per_p = pl.cdiv(rows_per_p, SUBLANE) * SUBLANE
    tile_m = min(TILE_M_MAX, rows_per_p)
    grid_k = pl.cdiv(rows_per_p, tile_m)
    rows_per_p = grid_k * tile_m
    padded = NUM_PARALLEL * rows_per_p * LANE

    if padded != n:
        # Sentinel padding: pred = -1e4, true = 0 gives a per-element loss of
        # exactly 0, so the kernel needs no tail masking.  The copy only
        # happens when the input is not already block-aligned.
        pred_flat = jnp.full((padded,), -1e4, jnp.float32).at[:n].set(pred_flat)
        true_flat = jnp.zeros((padded,), jnp.float32).at[:n].set(true_flat)

    pred3 = pred_flat.reshape(NUM_PARALLEL, rows_per_p, LANE)
    true3 = true_flat.reshape(NUM_PARALLEL, rows_per_p, LANE)

    kernel = functools.partial(_bce_blur_kernel, inv_alpha=inv_alpha)

    partials = pl.pallas_call(
        kernel,
        out_shape=jax.ShapeDtypeStruct((NUM_PARALLEL, SUBLANE, LANE), jnp.float32),
        grid_spec=pltpu.PrefetchScalarGridSpec(
            num_scalar_prefetch=0,
            grid=(NUM_PARALLEL, grid_k),
            in_specs=[
                pl.BlockSpec((None, tile_m, LANE), lambda p, k: (p, k, 0)),
                pl.BlockSpec((None, tile_m, LANE), lambda p, k: (p, k, 0)),
            ],
            out_specs=pl.BlockSpec((None, SUBLANE, LANE), lambda p, k: (p, 0, 0)),
        ),
        compiler_params=pltpu.CompilerParams(
            dimension_semantics=("parallel", "arbitrary")),
    )(pred3, true3)

    # Tiny tail: sum the (P, 8, 128) per-core partials and divide by the true
    # element count.
    return jnp.sum(partials) / jnp.float32(n)


def _reference(pred, true, alpha=0.05):
    x = pred.astype(jnp.float32)
    y = true.astype(jnp.float32)
    bce = jnp.maximum(x, 0.0) - x * y + jnp.log1p(jnp.exp(-jnp.abs(x)))
    p = jax.nn.sigmoid(x)
    dx = p - y
    af = 1.0 - jnp.exp((dx - 1.0) / (alpha + 1e-4))
    return jnp.mean(bce * af)


if __name__ == "__main__":
    key = jax.random.PRNGKey(0)
    k1, k2 = jax.random.split(key)
    # NCHW inputs, as the PyTorch module would receive.
    pred = jax.random.normal(k1, (2, 4, 16, 16), dtype=jnp.float32)
    true = (jax.random.uniform(k2, (2, 4, 16, 16)) > 0.5).astype(jnp.float32)

    loss = bce_blur_with_logits_loss(pred, true, alpha=0.05)
    jax.block_until_ready(loss)

    ref = _reference(pred, true, alpha=0.05)
    assert jnp.allclose(loss, ref, rtol=1e-5, atol=1e-6), (loss, ref)
    print("KERNEL_OK")
</pallas_src>

<mosaic_0001>
module attributes {stable_mosaic.version = 11 : i64} {
  func.func @_bce_blur_kernel(%arg0: i32, %arg1: i32, %arg2: memref<1x8x128xf32, #tpu.memory_space<vmem>>, %arg3: memref<1x8x128xf32, #tpu.memory_space<vmem>>, %arg4: memref<1x8x128xf32, #tpu.memory_space<vmem>>) attributes {dimension_semantics = [#tpu.dimension_semantics<parallel>, #tpu.dimension_semantics<arbitrary>], iteration_bounds = array<i64: 2, 1>, scalar_prefetch = 0 : i64, scratch_operands = 0 : i64, tpu.core_type = #tpu.core_type<tc>, window_params = [{transform_indices = @transform_0, window_bounds = array<i64: 1, 8, 128>}, {transform_indices = @transform_1, window_bounds = array<i64: 1, 8, 128>}, {transform_indices = @transform_2, window_bounds = array<i64: 1, 8, 128>}]} {
    %c0_i32 = arith.constant 0 : i32
    %0 = arith.cmpi eq, %arg1, %c0_i32 : i32
    %1 = arith.extui %0 : i1 to i32
    %c0_i32_0 = arith.constant 0 : i32
    %2 = arith.cmpi ne, %1, %c0_i32_0 : i32
    scf.if %2 {
      %cst_20 = arith.constant 0.000000e+00 : f32
      %42 = vector.broadcast %cst_20 : f32 to vector<8x128xf32>
      %c0_21 = arith.constant 0 : index
      %c0_22 = arith.constant 0 : index
      %c0_23 = arith.constant 0 : index
      %43 = vector.load %arg4[%c0_21, %c0_22, %c0_23] : memref<1x8x128xf32, #tpu.memory_space<vmem>>, vector<1x8x128xf32>
      %44 = vector.shape_cast %43 : vector<1x8x128xf32> to vector<8x128xf32>
      %45 = vector.shape_cast %42 : vector<8x128xf32> to vector<1x8x128xf32>
      tpu.vector_store %arg4[%c0_21, %c0_22, %c0_23], %45 {strides = array<i32>} : memref<1x8x128xf32, #tpu.memory_space<vmem>>, vector<1x8x128xf32>,
    } else {
    }
    %c0 = arith.constant 0 : index
    %c0_1 = arith.constant 0 : index
    %c0_2 = arith.constant 0 : index
    %3 = vector.load %arg2[%c0, %c0_1, %c0_2] : memref<1x8x128xf32, #tpu.memory_space<vmem>>, vector<1x8x128xf32>
    %4 = vector.shape_cast %3 : vector<1x8x128xf32> to vector<8x128xf32>
    %c0_3 = arith.constant 0 : index
    %c0_4 = arith.constant 0 : index
    %c0_5 = arith.constant 0 : index
    %5 = vector.load %arg3[%c0_3, %c0_4, %c0_5] : memref<1x8x128xf32, #tpu.memory_space<vmem>>, vector<1x8x128xf32>
    %6 = vector.shape_cast %5 : vector<1x8x128xf32> to vector<8x128xf32>
    %7 = math.absf %4 : vector<8x128xf32>
    %cst = arith.constant 0.000000e+00 : f32
    %8 = vector.broadcast %cst : f32 to vector<8x128xf32>
    %9 = arith.subf %8, %7 : vector<8x128xf32>
    %10 = math.exp %9 : vector<8x128xf32>
    %cst_6 = arith.constant 0.000000e+00 : f32
    %11 = vector.broadcast %cst_6 : f32 to vector<8x128xf32>
    %12 = arith.maximumf %4, %11 : vector<8x128xf32>
    %13 = arith.mulf %4, %6 : vector<8x128xf32>
    %14 = arith.subf %12, %13 : vector<8x128xf32>
    %15 = math.log1p %10 : vector<8x128xf32>
    %16 = arith.addf %14, %15 : vector<8x128xf32>
    %cst_7 = arith.constant 1.000000e+00 : f32
    %17 = vector.broadcast %cst_7 : f32 to vector<8x128xf32>
    %18 = arith.addf %17, %10 : vector<8x128xf32>
    %cst_8 = arith.constant 1.000000e+00 : f32
    %19 = vector.broadcast %cst_8 : f32 to vector<8x128xf32>
    %20 = arith.divf %19, %18 : vector<8x128xf32>
    %cst_9 = arith.constant 0.000000e+00 : f32
    %21 = vector.broadcast %cst_9 : f32 to vector<8x128xf32>
    %22 = arith.cmpf oge, %4, %21 : vector<8x128xf32>
    %23 = arith.mulf %10, %20 : vector<8x128xf32>
    %24 = arith.select %22, %20, %23 : vector<8x128xi1>, vector<8x128xf32>
    %25 = arith.subf %24, %6 : vector<8x128xf32>
    %cst_10 = arith.constant 1.000000e+00 : f32
    %26 = vector.broadcast %cst_10 : f32 to vector<8x128xf32>
    %27 = arith.subf %25, %26 : vector<8x128xf32>
    %cst_11 = arith.constant 19.9600792 : f32
    %28 = vector.broadcast %cst_11 : f32 to vector<8x128xf32>
    %29 = arith.mulf %27, %28 : vector<8x128xf32>
    %30 = math.exp %29 : vector<8x128xf32>
    %cst_12 = arith.constant 1.000000e+00 : f32
    %31 = vector.broadcast %cst_12 : f32 to vector<8x128xf32>
    %32 = arith.subf %31, %30 : vector<8x128xf32>
    %33 = arith.mulf %16, %32 : vector<8x128xf32>
    %c0_13 = arith.constant 0 : index
    %c0_14 = arith.constant 0 : index
    %c0_15 = arith.constant 0 : index
    %34 = vector.load %arg4[%c0_13, %c0_14, %c0_15] : memref<1x8x128xf32, #tpu.memory_space<vmem>>, vector<1x8x128xf32>
    %35 = vector.shape_cast %34 : vector<1x8x128xf32> to vector<8x128xf32>
    %36 = vector.shape_cast %33 : vector<8x128xf32> to vector<1x8x128xf32>
    %cst_16 = arith.constant dense<0.000000e+00> : vector<8x128xf32>
    %37 = vector.multi_reduction <add>, %36, %cst_16 [0] : vector<1x8x128xf32> to vector<8x128xf32>
    %38 = arith.addf %35, %37 : vector<8x128xf32>
    %c0_17 = arith.constant 0 : index
    %c0_18 = arith.constant 0 : index
    %c0_19 = arith.constant 0 : index
    %39 = vector.load %arg4[%c0_17, %c0_18, %c0_19] : memref<1x8x128xf32, #tpu.memory_space<vmem>>, vector<1x8x128xf32>
    %40 = vector.shape_cast %39 : vector<1x8x128xf32> to vector<8x128xf32>
    %41 = vector.shape_cast %38 : vector<8x128xf32> to vector<1x8x128xf32>
    tpu.vector_store %arg4[%c0_17, %c0_18, %c0_19], %41 {strides = array<i32>} : memref<1x8x128xf32, #tpu.memory_space<vmem>>, vector<1x8x128xf32>,
    return
  }
  func.func @transform_0(%arg0: i32, %arg1: i32) -> (i32, i32, i32) {
    %c0_i32 = arith.constant 0 : i32
    %c0_i32_0 = arith.constant 0 : i32
    return %arg0, %arg1, %c0_i32 : i32, i32, i32
  }
  func.func @transform_1(%arg0: i32, %arg1: i32) -> (i32, i32, i32) {
    %c0_i32 = arith.constant 0 : i32
    %c0_i32_0 = arith.constant 0 : i32
    return %arg0, %arg1, %c0_i32 : i32, i32, i32
  }
  func.func @transform_2(%arg0: i32, %arg1: i32) -> (i32, i32, i32) {
    %c0_i32 = arith.constant 0 : i32
    %c0_i32_0 = arith.constant 0 : i32
    %c0_i32_1 = arith.constant 0 : i32
    return %arg0, %c0_i32, %c0_i32_0 : i32, i32, i32
  }
}

</mosaic_0001>

<llo_original>
// kernel: tpu_custom_call.1
$region0: #{tpu_custom_call.1}
  #allocation0 [shape = 'u32[]', space=smem, size = 0x4, offset = 0x4, fixed_abs, tag = 'smem constant byte address 0x4 - core index']
  #allocation1 [shape = 'u32[72,128]{1,0:T(1,128)}', space=vmem, size = 0x9000, scoped, tag = 'internal scratch']
  %s0 = inlined_call_operand.hbm [shape: f32[2,8,128], index: 0, kind: input, shape index: {}]
  %s1 = inlined_call_operand.hbm [shape: f32[2,8,128], index: 1, kind: input, shape index: {}]
  %s2 = inlined_call_operand.hbm [shape: f32[2,8,128], index: 2, kind: output, shape index: {}]
  %s3 = sld [smem:[#allocation0]]
  $region53: #{tpu_custom_call.1} parent=0
    _
  %s5 = ssub.s32 1, %s3
  %s6 = scalar_select 0, %s5, %s3
  $region1: #{tpu_custom_call.1} parent=0
    #allocation2 [shape = 'u8[8192]{0}', space=vmem, size = 0x2000, scoped, tag = 'input window, operand 0']
    #allocation3 [shape = 's32[2]{0}', space=sflag, size = 0x8, scoped, tag = 'scoped memory for tpu_custom_call.1']
    #allocation4 [shape = 's32[2]{0}', space=sflag, size = 0x8, scoped, tag = 'scoped memory for tpu_custom_call.1']
    #allocation5 [shape = 'u8[8192]{0}', space=vmem, size = 0x2000, scoped, tag = 'input window, operand 1']
    #allocation6 [shape = 's32[2]{0}', space=sflag, size = 0x8, scoped, tag = 'scoped memory for tpu_custom_call.1']
    #allocation7 [shape = 'u8[8192]{0}', space=vmem, size = 0x2000, scoped, tag = 'output window, operand 0']
    %7 = vsyncpa [#allocation3], 0
    %s8 = scalar_lea.sflag [#allocation3], 1
    %9 = vsyncpa %s8, 0
    %10 = vsyncpa [#allocation6], 0
    %s11 = scalar_lea.sflag [#allocation6], 1
    %12 = vsyncpa %s11, 0
    %13 = vsyncpa [#allocation4], 0
    %s14 = scalar_lea.sflag [#allocation4], 1
    %15 = vsyncpa %s14, 0
    loop: start=0, step=1, limit=4
    $region2: #{tpu_custom_call.1} parent=1 // loop_pre_header
      _
    $region3: #{tpu_custom_call.1} parent=1 // loop_header
      %s17 = sphi 0, %s21
      %p18 = scmp.ge.s32.totalorder %s17, 4
      %s24 = sphi 0, %s36
      %s25 = sphi 0, %s32
      %s26 = sphi 0, %s24
      %s27 = sphi 0, %s25
      %s28 = sphi 0, %s26
      %s29 = sphi 0, %s27
      %s41 = sphi 0, %s43
      %s44 = sphi 0, %s41
      %s45 = sphi 0, %s44
      %s61 = sphi 0, %s45
      %s69 = sphi 0, %s71
      %s72 = sphi 0, %s69
      %s73 = sphi 0, %s72
      %s89 = sphi 0, %s73
      %s95 = sphi 0, %s97
      %s98 = sphi 0, %s95
      %s99 = sphi 0, %s98
      %s115 = sphi 0, %s99
    $region4: #{tpu_custom_call.1} parent=1 // loop_header_branch
      %20 = sbr.rel (%p18) target = $region8
    $region5: #{tpu_custom_call.1} parent=1 // loop_body
      %s22 = ssub.s32 %s17, 1
      %s23 = ssub.s32 %s17, 2
      %s30 = sadd.s32 1, %s25
      %p31 = scmp.ge.s32.totalorder %s30, 1
      %s32 = scalar_select %p31, 0, %s30
      %s33 = sadd.s32 1, %s24
      %s34 = scalar_select %p31, %s33, %s24
      %p35 = scmp.ge.s32.totalorder %s34, 2
      %s36 = scalar_select %p35, 0, %s34
      %s37 = ssub.s32 %s24, %s36
      %s38 = ssub.s32 %s25, %s32
      %s39 = sor.u32 %s37, %s38
      %p40 = scmp.eq.s32.totalorder %s39, 0
      %s42 = sadd.s32 %s41, 1
      %s43 = scalar_select %p40, %s41, %s42
      %p46 = pneg %p40
      %p47 = scmp.eq.s32.totalorder %s17, 1
      %p48 = por %p46, %p47
      %p49 = scmp.ne.s32.totalorder %s41, %s44
      %p50 = scmp.eq.s32.totalorder %s17, 0
      %p51 = por %p49, %p50
      %p52 = scmp.ne.s32.totalorder %s41, %s44
      %p53 = scmp.eq.s32.totalorder %s22, 1
      %p54 = por %p52, %p53
      %p55 = scmp.ne.s32.totalorder %s44, %s45
      %p56 = scmp.eq.s32.totalorder %s22, 0
      %p57 = por %p55, %p56
      %p58 = scmp.ne.s32.totalorder %s44, %s45
      %p59 = scmp.eq.s32.totalorder %s23, 1
      %p60 = por %p58, %p59
      %p62 = scmp.ne.s32.totalorder %s45, %s61
      %p63 = scmp.eq.s32.totalorder %s23, 0
      %p64 = por %p62, %p63
      %s65 = ssub.s32 %s24, %s36
      %s66 = ssub.s32 %s25, %s32
      %s67 = sor.u32 %s65, %s66
      %p68 = scmp.eq.s32.totalorder %s67, 0
      %s70 = sadd.s32 %s69, 1
      %s71 = scalar_select %p68, %s69, %s70
      %p74 = pneg %p68
      %p75 = scmp.eq.s32.totalorder %s17, 1
      %p76 = por %p74, %p75
      %p77 = scmp.ne.s32.totalorder %s69, %s72
      %p78 = scmp.eq.s32.totalorder %s17, 0
      %p79 = por %p77, %p78
      %p80 = scmp.ne.s32.totalorder %s69, %s72
      %p81 = scmp.eq.s32.totalorder %s22, 1
      %p82 = por %p80, %p81
      %p83 = scmp.ne.s32.totalorder %s72, %s73
      %p84 = scmp.eq.s32.totalorder %s22, 0
      %p85 = por %p83, %p84
      %p86 = scmp.ne.s32.totalorder %s72, %s73
      %p87 = scmp.eq.s32.totalorder %s23, 1
      %p88 = por %p86, %p87
      %p90 = scmp.ne.s32.totalorder %s73, %s89
      %p91 = scmp.eq.s32.totalorder %s23, 0
      %p92 = por %p90, %p91
      %s93 = ssub.s32 %s24, %s36
      %p94 = scmp.eq.s32.totalorder %s93, 0
      %s96 = sadd.s32 %s95, 1
      %s97 = scalar_select %p94, %s95, %s96
      %p100 = pneg %p94
      %p101 = scmp.eq.s32.totalorder %s17, 1
      %p102 = por %p100, %p101
      %p103 = scmp.ne.s32.totalorder %s95, %s98
      %p104 = scmp.eq.s32.totalorder %s17, 0
      %p105 = por %p103, %p104
      %p106 = scmp.ne.s32.totalorder %s95, %s98
      %p107 = scmp.eq.s32.totalorder %s22, 1
      %p108 = por %p106, %p107
      %p109 = scmp.ne.s32.totalorder %s98, %s99
      %p110 = scmp.eq.s32.totalorder %s22, 0
      %p111 = por %p109, %p110
      %p112 = scmp.ne.s32.totalorder %s98, %s99
      %p113 = scmp.eq.s32.totalorder %s23, 1
      %p114 = por %p112, %p113
      %p116 = scmp.ne.s32.totalorder %s99, %s115
      %p117 = scmp.eq.s32.totalorder %s23, 0
      %p118 = por %p116, %p117
      %p119 = scmp.le.s32.totalorder 1, %s17
      %p120 = scmp.lt.s32.totalorder %s17, 3
      %p121 = pnand %p119, %p120
      %p122 = pneg %p121
      // Predicated region
      $region9: #{tpu_custom_call.1} parent=5 // pred_check
        _
      $region10: #{tpu_custom_call.1} parent=5 // pred_check_branch
        %124 = sbr.rel (%p121) target = $region12
      $region11: #{tpu_custom_call.1} parent=5 // pred_region
        %s125 = ssub.s32 %s17, 1
      $region12: #{tpu_custom_call.1} parent=5 // pred_fallthru
        _
      %p126 = scmp.lt.s32.totalorder %s17, 2
      // Predicated region
      $region13: #{tpu_custom_call.1} parent=5 // pred_check
        %p127 = pneg %p126
      $region14: #{tpu_custom_call.1} parent=5 // pred_check_branch
        %129 = sbr.rel (%p127) target = $region16
      $region15: #{tpu_custom_call.1} parent=5 // pred_region
        // Predicated region
        $region17: #{tpu_custom_call.1} parent=15 // pred_check
          %p130 = pneg %p51
        $region18: #{tpu_custom_call.1} parent=15 // pred_check_branch
          %132 = sbr.rel (%p130) target = $region20
        $region19: #{tpu_custom_call.1} parent=15 // pred_region
          %s133 = sand.u32 %s41, 1
          %s134 = scalar_lea.sflag [#allocation3], %s133
          %s135 = sand.u32 %s41, 1
          %s136 = smul.addr %s135, 8
          %s137 = scalar_lea.vmem [#allocation2], %s136
          %139 = vsyncadd %s134, 0
          %s140 = sadd.s32 %s25, %s24
          %s141 = smul.addr %s140, 8
          %s142 = scalar_lea.hbm %s0, %s141
          %s144 = sshll.u32 %s142, 4
          %s145 = int_to_ptr.hbm [resolvable:$true] %s144
          %s146 = sshll.u32 %s137, 4
          %s147 = int_to_ptr.vmem [resolvable:$true] %s146
          %149 = dma.hbm_to_vmem [thread:$0]  %s145, 128, %s147, %s134
        $region20: #{tpu_custom_call.1} parent=15 // pred_fallthru
          _
        // Predicated region
        $region21: #{tpu_custom_call.1} parent=15 // pred_check
          %p150 = pneg %p79
        $region22: #{tpu_custom_call.1} parent=15 // pred_check_branch
          %152 = sbr.rel (%p150) target = $region24
        $region23: #{tpu_custom_call.1} parent=15 // pred_region
          %s153 = sand.u32 %s69, 1
          %s154 = scalar_lea.sflag [#allocation6], %s153
          %s155 = sand.u32 %s69, 1
          %s156 = smul.addr %s155, 8
          %s157 = scalar_lea.vmem [#allocation5], %s156
          %159 = vsyncadd %s154, 0
          %s160 = sadd.s32 %s25, %s24
          %s161 = smul.addr %s160, 8
          %s162 = scalar_lea.hbm %s1, %s161
          %s164 = sshll.u32 %s162, 4
          %s165 = int_to_ptr.hbm [resolvable:$true] %s164
          %s166 = sshll.u32 %s157, 4
          %s167 = int_to_ptr.vmem [resolvable:$true] %s166
          %169 = dma.hbm_to_vmem [thread:$0]  %s165, 128, %s167, %s154
        $region24: #{tpu_custom_call.1} parent=15 // pred_fallthru
          _
      $region16: #{tpu_custom_call.1} parent=5 // pred_fallthru
        _
      %p170 = scmp.le.s32.totalorder 1, %s17
      %p171 = scmp.lt.s32.totalorder %s17, 3
      %p172 = pnand %p170, %p171
      %p173 = pneg %p172
      // Predicated region
      $region25: #{tpu_custom_call.1} parent=5 // pred_check
        _
      $region26: #{tpu_custom_call.1} parent=5 // pred_check_branch
        %175 = sbr.rel (%p172) target = $region28
      $region27: #{tpu_custom_call.1} parent=5 // pred_region
        %s176 = ssub.s32 %s17, 1
        %s177 = sand.u32 %s44, 1
        %s178 = scalar_lea.sflag [#allocation3], %s177
        %s179 = sand.u32 %s44, 1
        %s180 = smul.addr %s179, 8
        %s181 = scalar_lea.vmem [#allocation2], %s180
        // Predicated region
        $region29: #{tpu_custom_call.1} parent=27 // pred_check
          %p182 = pneg %p57
        $region30: #{tpu_custom_call.1} parent=27 // pred_check_branch
          %184 = sbr.rel (%p182) target = $region32
        $region31: #{tpu_custom_call.1} parent=27 // pred_region
          %186 = dma.done %s178, 128
        $region32: #{tpu_custom_call.1} parent=27 // pred_fallthru
          _
        %s187 = sand.u32 %s72, 1
        %s188 = scalar_lea.sflag [#allocation6], %s187
        %s189 = sand.u32 %s72, 1
        %s190 = smul.addr %s189, 8
        %s191 = scalar_lea.vmem [#allocation5], %s190
        // Predicated region
        $region33: #{tpu_custom_call.1} parent=27 // pred_check
          %p192 = pneg %p85
        $region34: #{tpu_custom_call.1} parent=27 // pred_check_branch
          %194 = sbr.rel (%p192) target = $region36
        $region35: #{tpu_custom_call.1} parent=27 // pred_region
          %196 = dma.done %s188, 128
        $region36: #{tpu_custom_call.1} parent=27 // pred_fallthru
          _
        %s197 = sand.u32 %s44, 1
        %s198 = scalar_lea.sflag [#allocation3], %s197
        %s199 = sand.u32 %s44, 1
        %s200 = smul.addr %s199, 8
        %s201 = scalar_lea.vmem [#allocation2], %s200
        %p202 = pneg %p57
        %p203 = pneg %p54
        %s204 = sand.u32 %s72, 1
        %s205 = scalar_lea.sflag [#allocation6], %s204
        %s206 = sand.u32 %s72, 1
        %s207 = smul.addr %s206, 8
        %s208 = scalar_lea.vmem [#allocation5], %s207
        %p209 = pneg %p85
        %p210 = pneg %p82
        %p211 = pneg %p111
        %p212 = pneg %p108
        %s213 = sand.u32 %s98, 1
        %s214 = scalar_lea.sflag [#allocation4], %s213
        %s215 = sand.u32 %s98, 1
        %s216 = smul.addr %s215, 8
        %s217 = scalar_lea.vmem [#allocation7], %s216
        %p218 = scmp.eq.s32.totalorder %s27, 0
        // Predicated region
        $region37: #{tpu_custom_call.1} parent=27 // pred_check
          %p219 = pneg %p218
        $region38: #{tpu_custom_call.1} parent=27 // pred_check_branch
          %221 = sbr.rel (%p219) target = $region40
        $region39: #{tpu_custom_call.1} parent=27 // pred_region
          %222 = vst [vmem:[%s217] sm:$0xff] 0.0
        $region40: #{tpu_custom_call.1} parent=27 // pred_fallthru
          _
        %v223 = vld [vmem:[%s181] sm:$0xff]
        %v224 = vld [vmem:[%s191] sm:$0xff]
        %v225 = vand.u32 2147483647, %v223
        %v226 = vsub.f32 0.0, %v225
        %v227 = vmul.f32 %v226, 1.442695
        %v228 = vpow.pop %v227
        %v229 = vmax.f32 %v223, 0.0
        %v230 = vmul.f32 %v223, %v224
        %v231 = vsub.f32 %v229, %v230
        %v232 = vadd.f32 %v228, 1.0
        %v233 = vlog2.pop %v232
        %v234 = vmul.f32 %v233, 0.6931472
        %v235 = vmul.f32 -0.5, %v228
        %v236 = vadd.f32 %v235, 1.0
        %v237 = vmul.f32 %v236, %v228
        %v238 = vand.u32 2147483647, %v228
        %vm239 = vcmp.lt.f32.partialorder %v238, 0.0004427343
        %v240 = vsel %vm239, %v237, %v234
        %v241 = vadd.f32 %v231, %v240
        %v242 = vadd.f32 %v228, 1.0
        %v243 = vrcp.pop %v242
        %v244 = vmul.f32 %v242, %v243
        %v245 = vsub.f32 1.0, %v244
        %v246 = vmul.f32 %v243, %v245
        %v247 = vadd.f32 %v243, %v246
        %vm248 = vweird.f32 %v242
        %vm249 = vweird.f32 %v243
        %vm250 = vmor %vm248, %vm249
        %v251 = vsel %vm250, %v243, %v247
        %v252 = vand.u32 2147483647, %v242
        %vm253 = vcmp.eq.f32.partialorder %v252, 8.507059e+37
        %v254 = vand.u32 %v242, 2147483648
        %v255 = vor.u32 1.1754944e-38, %v254
        %v256 = vsel %vm253, %v255, %v251
        %v257 = vmul.f32 1.0, %v256
        %vm258 = vcmp.ge.f32.partialorder %v223, 0.0
        %v259 = vmul.f32 %v228, %v257
        %v260 = vsel %vm258, %v257, %v259
        %v261 = vsub.f32 %v260, %v224
        %v262 = vsub.f32 %v261, 1.0
        %v263 = vmul.f32 %v262, 19.96008
        %v264 = vmul.f32 %v263, 1.442695
        %v265 = vpow.pop %v264
        %v266 = vsub.f32 1.0, %v265
        %v267 = vmul.f32 %v241, %v266
        %v268 = vld [vmem:[%s217] sm:$0xff]
        %v269 = vadd.f32 %v267, 0.0
        %v270 = vadd.f32 %v268, %v269
        %271 = vst [vmem:[%s217] sm:$0xff] %v270
        %s272 = sand.u32 %s98, 1
        %s273 = scalar_lea.sflag [#allocation4], %s272
        %s274 = sand.u32 %s98, 1
        %s275 = smul.addr %s274, 8
        %s276 = scalar_lea.vmem [#allocation7], %s275
        // Predicated region
        $region41: #{tpu_custom_call.1} parent=27 // pred_check
          %p277 = pneg %p108
        $region42: #{tpu_custom_call.1} parent=27 // pred_check_branch
          %279 = sbr.rel (%p277) target = $region44
        $region43: #{tpu_custom_call.1} parent=27 // pred_region
          %281 = vsyncadd %s273, 0
          %s282 = smul.addr %s26, 8
          %s283 = scalar_lea.hbm %s2, %s282
          %s285 = sshll.u32 %s276, 4
          %s286 = int_to_ptr.vmem [resolvable:$true] %s285
          %s287 = sshll.u32 %s283, 4
          %s288 = int_to_ptr.hbm [resolvable:$true] %s287
          %290 = dma.vmem_to_hbm [thread:$0]  %s286, 128, %s288, %s273
        $region44: #{tpu_custom_call.1} parent=27 // pred_fallthru
          _
      $region28: #{tpu_custom_call.1} parent=5 // pred_fallthru
        _
      %p291 = scmp.le.s32.totalorder 2, %s17
      // Predicated region
      $region45: #{tpu_custom_call.1} parent=5 // pred_check
        %p292 = pneg %p291
      $region46: #{tpu_custom_call.1} parent=5 // pred_check_branch
        %294 = sbr.rel (%p292) target = $region48
      $region47: #{tpu_custom_call.1} parent=5 // pred_region
        %s295 = ssub.s32 %s17, 2
        // Predicated region
        $region49: #{tpu_custom_call.1} parent=47 // pred_check
          %p296 = pneg %p114
        $region50: #{tpu_custom_call.1} parent=47 // pred_check_branch
          %298 = sbr.rel (%p296) target = $region52
        $region51: #{tpu_custom_call.1} parent=47 // pred_region
          %s299 = sand.u32 %s99, 1
          %s300 = scalar_lea.sflag [#allocation4], %s299
          %s301 = sand.u32 %s99, 1
          %s302 = smul.addr %s301, 8
          %s303 = scalar_lea.vmem [#allocation7], %s302
          %305 = dma.done %s300, 128
        $region52: #{tpu_custom_call.1} parent=47 // pred_fallthru
          _
      $region48: #{tpu_custom_call.1} parent=5 // pred_fallthru
        _
    $region6: #{tpu_custom_call.1} parent=1 // loop_footer
      %s21 = sadd.s32 1, %s17
    $region7: #{tpu_custom_call.1} parent=1 // loop_footer_branch
      %16 = sbr.rel target = $region3
    $region8: #{tpu_custom_call.1} parent=1 // loop_exit
      _
    %306 = vsyncpa [#allocation3], 1
    %s307 = scalar_lea.sflag [#allocation3], 1
    %308 = vsyncpa %s307, 1
    %309 = vsyncpa [#allocation6], 1
    %s310 = scalar_lea.sflag [#allocation6], 1
    %311 = vsyncpa %s310, 1
    %312 = vsyncpa [#allocation4], 1
    %s313 = scalar_lea.sflag [#allocation4], 1
    %314 = vsyncpa %s313, 1

</llo_original>
